<compile_context>
chip_gen: v6e
topology: v6e:2x2x1
jax: 0.10.0
libtpu: 0.0.40
codegen_flags: <defaults>
</compile_context>

<pallas_src>
import functools

import jax
import jax.numpy as jnp
from jax.experimental import pallas as pl
from jax.experimental.pallas import tpu as pltpu

LANE = 128               # TPU lane width; hidden and action dims padded to this.
MAX_ROWS_PER_BLOCK = 2048  # v7x-safe VMEM budget (~3.5 KB/row -> ~7 MiB << 32 MiB).


def _round_up(x, m):
    return ((x + m - 1) // m) * m


def policy_fwd_kernel(x_ref, w1_ref, b1_ref, w2_ref, b2_ref, w3_ref, b3_ref,
                      out_ref, *, action_dim):
    # x: (TB, S) f32 ; w1: (S, H) bf16 ; w2: (H, H) bf16 ; w3: (H, 128) bf16
    # biases: (1, *) f32 ; out: (TB, 128) f32
    x = x_ref[...]

    # fc1 + relu  (bf16 MXU operands, f32 accumulation, f32 elementwise)
    h1 = jnp.dot(x.astype(jnp.bfloat16), w1_ref[...],
                 preferred_element_type=jnp.float32)
    h1 = jnp.maximum(h1 + b1_ref[...], 0.0)

    # fc2 + relu
    h2 = jnp.dot(h1.astype(jnp.bfloat16), w2_ref[...],
                 preferred_element_type=jnp.float32)
    h2 = jnp.maximum(h2 + b2_ref[...], 0.0)

    # action_layer + softmax over the real action lanes only
    logits = jnp.dot(h2.astype(jnp.bfloat16), w3_ref[...],
                     preferred_element_type=jnp.float32)
    logits = logits + b3_ref[...]

    lane = jax.lax.broadcasted_iota(jnp.int32, logits.shape, 1)
    logits = jnp.where(lane < action_dim, logits, jnp.float32(-1e30))

    logits = logits - jnp.max(logits, axis=-1, keepdims=True)
    e = jnp.exp(logits)
    denom = jnp.sum(e, axis=-1, keepdims=True)
    # Exact divide: PPO log-prob ratios / categorical sampling need properly
    # normalized rows; the division unit has plenty of slack at these shapes.
    out_ref[...] = e / denom


def _choose_batch_tile(B):
    """Pick (tile, padded_batch) per the review's heuristic."""
    if B <= MAX_ROWS_PER_BLOCK:
        # Single grid step: per-step overhead dominates at these shapes.
        tb = max(8, _round_up(B, 8))
        return tb, tb
    # Roughly equal steps with minimal row padding (and >= 2 parallel steps,
    # which lets v7x's two TensorCores shard the batch for large B).
    n_steps = -(-B // MAX_ROWS_PER_BLOCK)
    tb = _round_up(-(-B // n_steps), 8)
    return tb, _round_up(B, tb)


def policy_forward(state, params, *, action_dim, trim=True):
    """state: (B, state_dim) f32 -> action_probs.

    trim=True  -> (B, action_dim) f32 (matches the PyTorch forward exactly).
    trim=False -> lane-dense (B_padded, 128) f32 buffer; padded lanes are
                  exactly 0, so downstream code may consume it directly and
                  skip the extra wrapper-side slice op.
    """
    w1, b1, w2, b2, w3, b3 = params
    B, S = state.shape
    H = w1.shape[1]       # padded hidden (128)
    AP = w3.shape[1]      # lane-dense padded action dim (128)

    tb, bp = _choose_batch_tile(B)
    if bp != B:
        state = jnp.pad(state, ((0, bp - B), (0, 0)))
    n_steps = bp // tb

    # Advisory cost so XLA can schedule/overlap this tiny custom call.
    cost = pl.CostEstimate(
        flops=2 * bp * (S * H + H * H + H * AP),
        transcendentals=bp * AP,
        bytes_accessed=(bp * S * 4                       # x (f32)
                        + (S * H + H * H + H * AP) * 2   # weights (bf16)
                        + (H + H + AP) * 4               # biases (f32)
                        + bp * AP * 4),                  # out (f32)
    )

    out = pl.pallas_call(
        functools.partial(policy_fwd_kernel, action_dim=action_dim),
        out_shape=jax.ShapeDtypeStruct((bp, AP), jnp.float32),
        grid=(n_steps,),
        in_specs=[
            pl.BlockSpec((tb, S), lambda i: (i, 0)),     # activations: tiled over batch
            pl.BlockSpec((S, H), lambda i: (0, 0)),      # weights/biases: VMEM-resident
            pl.BlockSpec((1, H), lambda i: (0, 0)),
            pl.BlockSpec((H, H), lambda i: (0, 0)),
            pl.BlockSpec((1, H), lambda i: (0, 0)),
            pl.BlockSpec((H, AP), lambda i: (0, 0)),
            pl.BlockSpec((1, AP), lambda i: (0, 0)),
        ],
        out_specs=pl.BlockSpec((tb, AP), lambda i: (i, 0)),
        compiler_params=pltpu.CompilerParams(
            dimension_semantics=("parallel",)),
        cost_estimate=cost,
    )(state, w1, b1, w2, b2, w3, b3)

    if not trim:
        return out
    return out[:B, :action_dim]


def init_params(key, state_dim, action_dim, hidden=64,
                *, hidden_pad=LANE, lane_pad=LANE):
    """nn.Linear-style init U(-1/sqrt(fan_in), 1/sqrt(fan_in)) on the real
    fan_in/fan_out, then zero-padded to TPU-friendly shapes. Weights stored
    pre-transposed as (in, out) in bf16; biases as (1, out) in f32."""
    ks = jax.random.split(key, 6)

    def linear(kw, kb, fan_in, fan_out, pad_in, pad_out):
        bound = float(fan_in) ** -0.5
        w = jax.random.uniform(kw, (fan_in, fan_out), jnp.float32, -bound, bound)
        b = jax.random.uniform(kb, (fan_out,), jnp.float32, -bound, bound)
        w_p = jnp.zeros((pad_in, pad_out), jnp.float32).at[:fan_in, :fan_out].set(w)
        b_p = jnp.zeros((1, pad_out), jnp.float32).at[0, :fan_out].set(b)
        return w_p.astype(jnp.bfloat16), b_p

    w1, b1 = linear(ks[0], ks[1], state_dim, hidden, state_dim, hidden_pad)
    w2, b2 = linear(ks[2], ks[3], hidden, hidden, hidden_pad, hidden_pad)
    w3, b3 = linear(ks[4], ks[5], hidden, action_dim, hidden_pad, lane_pad)
    return (w1, b1, w2, b2, w3, b3)


def policy_forward_ref(state, params, action_dim):
    """Plain-JAX reference with the same bf16 matmul operands / f32 accumulation."""
    w1, b1, w2, b2, w3, b3 = params
    h1 = jax.nn.relu(jnp.dot(state.astype(jnp.bfloat16), w1,
                             preferred_element_type=jnp.float32) + b1)
    h2 = jax.nn.relu(jnp.dot(h1.astype(jnp.bfloat16), w2,
                             preferred_element_type=jnp.float32) + b2)
    logits = jnp.dot(h2.astype(jnp.bfloat16), w3,
                     preferred_element_type=jnp.float32) + b3
    return jax.nn.softmax(logits[:, :action_dim], axis=-1)


if __name__ == "__main__":
    key = jax.random.PRNGKey(0)
    k_params, k_state = jax.random.split(key)

    state_dim = 32
    action_dim = 8
    params = init_params(k_params, state_dim, action_dim, hidden=64)

    # Case 1: small batch -> single grid step (the common PPO rollout shape).
    batch = 256
    state = jax.random.normal(k_state, (batch, state_dim), jnp.float32)
    probs = jax.block_until_ready(
        policy_forward(state, params, action_dim=action_dim))
    ref = policy_forward_ref(state, params, action_dim)
    assert probs.shape == (batch, action_dim)
    assert jnp.allclose(probs, ref, atol=2e-3, rtol=2e-3), "mismatch vs reference"
    assert jnp.allclose(jnp.sum(probs, axis=-1), 1.0, atol=1e-3), "rows must sum to ~1"

    # Case 2: batch above the 2048-row cap -> multi-step grid with minimal
    # row padding (2300 -> tile 1152, padded to 2304).
    batch2 = 2300
    state2 = jax.random.normal(jax.random.fold_in(k_state, 1),
                               (batch2, state_dim), jnp.float32)
    probs2 = jax.block_until_ready(
        policy_forward(state2, params, action_dim=action_dim))
    ref2 = policy_forward_ref(state2, params, action_dim)
    assert probs2.shape == (batch2, action_dim)
    assert jnp.allclose(probs2, ref2, atol=2e-3, rtol=2e-3), "mismatch vs reference (big B)"
    assert jnp.allclose(jnp.sum(probs2, axis=-1), 1.0, atol=1e-3), "rows must sum to ~1 (big B)"

    print("KERNEL_OK")
</pallas_src>

<mosaic_0001>
module attributes {stable_mosaic.version = 11 : i64} {
  func.func @policy_fwd_kernel(%arg0: i32, %arg1: memref<256x32xf32, #tpu.memory_space<vmem>>, %arg2: memref<32x128xbf16, #tpu.memory_space<vmem>>, %arg3: memref<1x128xf32, #tpu.memory_space<vmem>>, %arg4: memref<128x128xbf16, #tpu.memory_space<vmem>>, %arg5: memref<1x128xf32, #tpu.memory_space<vmem>>, %arg6: memref<128x128xbf16, #tpu.memory_space<vmem>>, %arg7: memref<1x128xf32, #tpu.memory_space<vmem>>, %arg8: memref<256x128xf32, #tpu.memory_space<vmem>>) attributes {dimension_semantics = [#tpu.dimension_semantics<parallel>], iteration_bounds = array<i64: 1>, scalar_prefetch = 0 : i64, scratch_operands = 0 : i64, tpu.core_type = #tpu.core_type<tc>, window_params = [{transform_indices = @transform_0, window_bounds = array<i64: 256, 32>}, {pipeline_mode = #tpu.pipeline_mode<synchronous>, transform_indices = @transform_1, window_bounds = array<i64: 32, 128>}, {pipeline_mode = #tpu.pipeline_mode<synchronous>, transform_indices = @transform_2, window_bounds = array<i64: 1, 128>}, {pipeline_mode = #tpu.pipeline_mode<synchronous>, transform_indices = @transform_3, window_bounds = array<i64: 128, 128>}, {pipeline_mode = #tpu.pipeline_mode<synchronous>, transform_indices = @transform_4, window_bounds = array<i64: 1, 128>}, {pipeline_mode = #tpu.pipeline_mode<synchronous>, transform_indices = @transform_5, window_bounds = array<i64: 128, 128>}, {pipeline_mode = #tpu.pipeline_mode<synchronous>, transform_indices = @transform_6, window_bounds = array<i64: 1, 128>}, {transform_indices = @transform_7, window_bounds = array<i64: 256, 128>}]} {
    %c0 = arith.constant 0 : index
    %c0_0 = arith.constant 0 : index
    %0 = vector.load %arg1[%c0, %c0_0] : memref<256x32xf32, #tpu.memory_space<vmem>>, vector<256x32xf32>
    %1 = arith.truncf %0 : vector<256x32xf32> to vector<256x32xbf16>
    %c0_1 = arith.constant 0 : index
    %c0_2 = arith.constant 0 : index
    %2 = vector.load %arg2[%c0_1, %c0_2] : memref<32x128xbf16, #tpu.memory_space<vmem>>, vector<32x128xbf16>
    %cst = arith.constant dense<0.000000e+00> : vector<256x128xf32>
    %3 = tpu.matmul %1, %2, %cst {dimension_numbers = #tpu.dot_dimension_numbers<[1], [0], [0], [1], [0, 0, 1, 1], [], []>} : vector<256x32xbf16>, vector<32x128xbf16>, vector<256x128xf32> -> vector<256x128xf32>
    %c0_3 = arith.constant 0 : index
    %c0_4 = arith.constant 0 : index
    %4 = vector.load %arg3[%c0_3, %c0_4] : memref<1x128xf32, #tpu.memory_space<vmem>>, vector<1x128xf32>
    %5 = vector.broadcast %4 : vector<1x128xf32> to vector<256x128xf32>
    %6 = arith.addf %3, %5 : vector<256x128xf32>
    %cst_5 = arith.constant 0.000000e+00 : f32
    %7 = vector.broadcast %cst_5 : f32 to vector<256x128xf32>
    %8 = arith.maximumf %6, %7 : vector<256x128xf32>
    %9 = arith.truncf %8 : vector<256x128xf32> to vector<256x128xbf16>
    %c0_6 = arith.constant 0 : index
    %c0_7 = arith.constant 0 : index
    %10 = vector.load %arg4[%c0_6, %c0_7] : memref<128x128xbf16, #tpu.memory_space<vmem>>, vector<128x128xbf16>
    %cst_8 = arith.constant dense<0.000000e+00> : vector<256x128xf32>
    %11 = tpu.matmul %9, %10, %cst_8 {dimension_numbers = #tpu.dot_dimension_numbers<[1], [0], [0], [1], [0, 0, 1, 1], [], []>} : vector<256x128xbf16>, vector<128x128xbf16>, vector<256x128xf32> -> vector<256x128xf32>
    %c0_9 = arith.constant 0 : index
    %c0_10 = arith.constant 0 : index
    %12 = vector.load %arg5[%c0_9, %c0_10] : memref<1x128xf32, #tpu.memory_space<vmem>>, vector<1x128xf32>
    %13 = vector.broadcast %12 : vector<1x128xf32> to vector<256x128xf32>
    %14 = arith.addf %11, %13 : vector<256x128xf32>
    %cst_11 = arith.constant 0.000000e+00 : f32
    %15 = vector.broadcast %cst_11 : f32 to vector<256x128xf32>
    %16 = arith.maximumf %14, %15 : vector<256x128xf32>
    %17 = arith.truncf %16 : vector<256x128xf32> to vector<256x128xbf16>
    %c0_12 = arith.constant 0 : index
    %c0_13 = arith.constant 0 : index
    %18 = vector.load %arg6[%c0_12, %c0_13] : memref<128x128xbf16, #tpu.memory_space<vmem>>, vector<128x128xbf16>
    %cst_14 = arith.constant dense<0.000000e+00> : vector<256x128xf32>
    %19 = tpu.matmul %17, %18, %cst_14 {dimension_numbers = #tpu.dot_dimension_numbers<[1], [0], [0], [1], [0, 0, 1, 1], [], []>} : vector<256x128xbf16>, vector<128x128xbf16>, vector<256x128xf32> -> vector<256x128xf32>
    %c0_15 = arith.constant 0 : index
    %c0_16 = arith.constant 0 : index
    %20 = vector.load %arg7[%c0_15, %c0_16] : memref<1x128xf32, #tpu.memory_space<vmem>>, vector<1x128xf32>
    %21 = vector.broadcast %20 : vector<1x128xf32> to vector<256x128xf32>
    %22 = arith.addf %19, %21 : vector<256x128xf32>
    %23 = tpu.iota {dimensions = array<i32: 1>} : vector<256x128xi32>
    %c8_i32 = arith.constant 8 : i32
    %24 = vector.broadcast %c8_i32 : i32 to vector<256x128xi32>
    %25 = arith.cmpi slt, %23, %24 : vector<256x128xi32>
    %cst_17 = arith.constant -1.000000e+30 : f32
    %26 = vector.broadcast %cst_17 : f32 to vector<256x128xf32>
    %27 = arith.select %25, %22, %26 : vector<256x128xi1>, vector<256x128xf32>
    %cst_18 = arith.constant dense<0xFF800000> : vector<256xf32>
    %28 = vector.multi_reduction <maximumf>, %27, %cst_18 [1] : vector<256x128xf32> to vector<256xf32>
    %29 = vector.shape_cast %28 : vector<256xf32> to vector<256x1xf32>
    %30 = vector.broadcast %29 : vector<256x1xf32> to vector<256x128xf32>
    %31 = arith.subf %27, %30 : vector<256x128xf32>
    %32 = math.exp %31 : vector<256x128xf32>
    %cst_19 = arith.constant dense<0.000000e+00> : vector<256xf32>
    %33 = vector.multi_reduction <add>, %32, %cst_19 [1] : vector<256x128xf32> to vector<256xf32>
    %34 = vector.shape_cast %33 : vector<256xf32> to vector<256x1xf32>
    %35 = vector.broadcast %34 : vector<256x1xf32> to vector<256x128xf32>
    %36 = arith.divf %32, %35 : vector<256x128xf32>
    %c0_20 = arith.constant 0 : index
    %c0_21 = arith.constant 0 : index
    %37 = vector.load %arg8[%c0_20, %c0_21] : memref<256x128xf32, #tpu.memory_space<vmem>>, vector<256x128xf32>
    tpu.vector_store %arg8[%c0_20, %c0_21], %36 {strides = array<i32>} : memref<256x128xf32, #tpu.memory_space<vmem>>, vector<256x128xf32>,
    return
  }
  func.func @transform_0(%arg0: i32) -> (i32, i32) {
    %c0_i32 = arith.constant 0 : i32
    %c0_i32_0 = arith.constant 0 : i32
    return %arg0, %c0_i32 : i32, i32
  }
  func.func @transform_1(%arg0: i32) -> (i32, i32) {
    %c0_i32 = arith.constant 0 : i32
    %c0_i32_0 = arith.constant 0 : i32
    %c0_i32_1 = arith.constant 0 : i32
    return %c0_i32, %c0_i32_0 : i32, i32
  }
  func.func @transform_2(%arg0: i32) -> (i32, i32) {
    %c0_i32 = arith.constant 0 : i32
    %c0_i32_0 = arith.constant 0 : i32
    %c0_i32_1 = arith.constant 0 : i32
    return %c0_i32, %c0_i32_0 : i32, i32
  }
  func.func @transform_3(%arg0: i32) -> (i32, i32) {
    %c0_i32 = arith.constant 0 : i32
    %c0_i32_0 = arith.constant 0 : i32
    %c0_i32_1 = arith.constant 0 : i32
    return %c0_i32, %c0_i32_0 : i32, i32
  }
  func.func @transform_4(%arg0: i32) -> (i32, i32) {
    %c0_i32 = arith.constant 0 : i32
    %c0_i32_0 = arith.constant 0 : i32
    %c0_i32_1 = arith.constant 0 : i32
    return %c0_i32, %c0_i32_0 : i32, i32
  }
  func.func @transform_5(%arg0: i32) -> (i32, i32) {
    %c0_i32 = arith.constant 0 : i32
    %c0_i32_0 = arith.constant 0 : i32
    %c0_i32_1 = arith.constant 0 : i32
    return %c0_i32, %c0_i32_0 : i32, i32
  }
  func.func @transform_6(%arg0: i32) -> (i32, i32) {
    %c0_i32 = arith.constant 0 : i32
    %c0_i32_0 = arith.constant 0 : i32
    %c0_i32_1 = arith.constant 0 : i32
    return %c0_i32, %c0_i32_0 : i32, i32
  }
  func.func @transform_7(%arg0: i32) -> (i32, i32) {
    %c0_i32 = arith.constant 0 : i32
    %c0_i32_0 = arith.constant 0 : i32
    return %arg0, %c0_i32 : i32, i32
  }
}

</mosaic_0001>

<llo_original>
// kernel: tpu_custom_call.1
$region0: #{tpu_custom_call.1}
  #allocation0 [shape = 'u32[]', space=smem, size = 0x4, offset = 0x4, fixed_abs, tag = 'smem constant byte address 0x4 - core index']
  #allocation1 [shape = 'u32[144,128]{1,0:T(1,128)}', space=vmem, size = 0x12000, scoped, tag = 'internal scratch']
  %s0 = inlined_call_operand.vmem [shape: f32[256,32], index: 0, kind: input, shape index: {}]
  %s1 = inlined_call_operand.vmem [shape: bf16[32,128], index: 1, kind: input, shape index: {}]
  %s2 = inlined_call_operand.vmem [shape: f32[1,128], index: 2, kind: input, shape index: {}]
  %s3 = inlined_call_operand.vmem [shape: bf16[128,128], index: 3, kind: input, shape index: {}]
  %s4 = inlined_call_operand.vmem [shape: f32[1,128], index: 4, kind: input, shape index: {}]
  %s5 = inlined_call_operand.vmem [shape: bf16[128,128], index: 5, kind: input, shape index: {}]
  %s6 = inlined_call_operand.vmem [shape: f32[1,128], index: 6, kind: input, shape index: {}]
  %s7 = inlined_call_operand.hbm [shape: f32[256,128], index: 7, kind: output, shape index: {}]
  %s8 = sld [smem:[#allocation0]]
  $region38: #{tpu_custom_call.1} parent=0
    _
  %s10 = ssub.s32 1, %s8
  %s11 = scalar_select 0, %s10, %s8
  $region1: #{tpu_custom_call.1} parent=0
    #allocation2 [shape = 'u8[131072]{0}', space=vmem, size = 0x20000, scoped, tag = 'output window, operand 0, single buffered']
    #allocation3 [shape = 's32[1]{0}', space=sflag, size = 0x4, scoped, tag = 'scoped memory for tpu_custom_call.1']
    %12 = vsyncpa [#allocation3], 0
    // Predicated region
    $region2: #{tpu_custom_call.1} parent=1 // pred_check
      _
    $region3: #{tpu_custom_call.1} parent=1 // pred_check_branch
      %14 = sbr.rel (0) target = $region5
    $region4: #{tpu_custom_call.1} parent=1 // pred_region
      _
    $region5: #{tpu_custom_call.1} parent=1 // pred_fallthru
      _
    // Predicated region
    $region6: #{tpu_custom_call.1} parent=1 // pred_check
      _
    $region7: #{tpu_custom_call.1} parent=1 // pred_check_branch
      %16 = sbr.rel (0) target = $region9
    $region8: #{tpu_custom_call.1} parent=1 // pred_region
      _
    $region9: #{tpu_custom_call.1} parent=1 // pred_fallthru
      _
    // Predicated region
    $region10: #{tpu_custom_call.1} parent=1 // pred_check
      _
    $region11: #{tpu_custom_call.1} parent=1 // pred_check_branch
      %18 = sbr.rel (0) target = $region13
    $region12: #{tpu_custom_call.1} parent=1 // pred_region
      _
    $region13: #{tpu_custom_call.1} parent=1 // pred_fallthru
      _
    // Predicated region
    $region14: #{tpu_custom_call.1} parent=1 // pred_check
      _
    $region15: #{tpu_custom_call.1} parent=1 // pred_check_branch
      %20 = sbr.rel (0) target = $region17
    $region16: #{tpu_custom_call.1} parent=1 // pred_region
      _
    $region17: #{tpu_custom_call.1} parent=1 // pred_fallthru
      _
    // Predicated region
    $region18: #{tpu_custom_call.1} parent=1 // pred_check
      _
    $region19: #{tpu_custom_call.1} parent=1 // pred_check_branch
      %22 = sbr.rel (0) target = $region21
    $region20: #{tpu_custom_call.1} parent=1 // pred_region
      _
    $region21: #{tpu_custom_call.1} parent=1 // pred_fallthru
      _
    // Predicated region
    $region22: #{tpu_custom_call.1} parent=1 // pred_check
      _
    $region23: #{tpu_custom_call.1} parent=1 // pred_check_branch
      %24 = sbr.rel (0) target = $region25
    $region24: #{tpu_custom_call.1} parent=1 // pred_region
      _
    $region25: #{tpu_custom_call.1} parent=1 // pred_fallthru
      _
    // Predicated region
    $region26: #{tpu_custom_call.1} parent=1 // pred_check
      _
    $region27: #{tpu_custom_call.1} parent=1 // pred_check_branch
      %26 = sbr.rel (0) target = $region29
    $region28: #{tpu_custom_call.1} parent=1 // pred_region
      _
    $region29: #{tpu_custom_call.1} parent=1 // pred_fallthru
      _
    %v28 = vld [vmem:[%s0] sm:$0xff]
    %v29 = vld [vmem:[%s0 + $0x8] sm:$0xff]
    %v30 = vld [vmem:[%s0 + $0x10] sm:$0xff]
    %v31 = vld [vmem:[%s0 + $0x18] sm:$0xff]
    %v32 = vld [vmem:[%s0 + $0x20] sm:$0xff]
    %v33 = vld [vmem:[%s0 + $0x28] sm:$0xff]
    %v34 = vld [vmem:[%s0 + $0x30] sm:$0xff]
    %v35 = vld [vmem:[%s0 + $0x38] sm:$0xff]
    %v36 = vld [vmem:[%s0 + $0x40] sm:$0xff]
    %v37 = vld [vmem:[%s0 + $0x48] sm:$0xff]
    %v38 = vld [vmem:[%s0 + $0x50] sm:$0xff]
    %v39 = vld [vmem:[%s0 + $0x58] sm:$0xff]
    %v40 = vld [vmem:[%s0 + $0x60] sm:$0xff]
    %v41 = vld [vmem:[%s0 + $0x68] sm:$0xff]
    %v42 = vld [vmem:[%s0 + $0x70] sm:$0xff]
    %v43 = vld [vmem:[%s0 + $0x78] sm:$0xff]
    %v44 = vld [vmem:[%s0 + $0x80] sm:$0xff]
    %v45 = vld [vmem:[%s0 + $0x88] sm:$0xff]
    %v46 = vld [vmem:[%s0 + $0x90] sm:$0xff]
    %v47 = vld [vmem:[%s0 + $0x98] sm:$0xff]
    %v48 = vld [vmem:[%s0 + $0xa0] sm:$0xff]
    %v49 = vld [vmem:[%s0 + $0xa8] sm:$0xff]
    %v50 = vld [vmem:[%s0 + $0xb0] sm:$0xff]
    %v51 = vld [vmem:[%s0 + $0xb8] sm:$0xff]
    %v52 = vld [vmem:[%s0 + $0xc0] sm:$0xff]
    %v53 = vld [vmem:[%s0 + $0xc8] sm:$0xff]
    %v54 = vld [vmem:[%s0 + $0xd0] sm:$0xff]
    %v55 = vld [vmem:[%s0 + $0xd8] sm:$0xff]
    %v56 = vld [vmem:[%s0 + $0xe0] sm:$0xff]
    %v57 = vld [vmem:[%s0 + $0xe8] sm:$0xff]
    %v58 = vld [vmem:[%s0 + $0xf0] sm:$0xff]
    %v59 = vld [vmem:[%s0 + $0xf8] sm:$0xff]
    %v60 = vpack.c.bf16 %v29, %v28
    %v61 = vpack.c.bf16 %v31, %v30
    %v62 = vpack.c.bf16 %v33, %v32
    %v63 = vpack.c.bf16 %v35, %v34
    %v64 = vpack.c.bf16 %v37, %v36
    %v65 = vpack.c.bf16 %v39, %v38
    %v66 = vpack.c.bf16 %v41, %v40
    %v67 = vpack.c.bf16 %v43, %v42
    %v68 = vpack.c.bf16 %v45, %v44
    %v69 = vpack.c.bf16 %v47, %v46
    %v70 = vpack.c.bf16 %v49, %v48
    %v71 = vpack.c.bf16 %v51, %v50
    %v72 = vpack.c.bf16 %v53, %v52
    %v73 = vpack.c.bf16 %v55, %v54
    %v74 = vpack.c.bf16 %v57, %v56
    %v75 = vpack.c.bf16 %v59, %v58
    %v76 = vld [vmem:[%s1] sm:$0xf]
    %v77 = vld [vmem:[%s1 + $0x4] sm:$0xf]
    %v78 = vld [vmem:[%s1 + $0x8] sm:$0xf]
    %v79 = vld [vmem:[%s1 + $0xc] sm:$0xf]
    %v80 = vld [vmem:[%s2] sm:$0x1]
    %v82 = vlaneseq
    %v83 = vshrl.u32 %v82, 7
    %v84 = vsub.s32 0, %v83
    %v85 = vrot.slane %v80, %v84
    %v91 = vunpack.c.l.b16 %v76
    %v92 = vunpack.c.l.b16 %v77
    %v93 = vunpack.c.l.b16 %v78
    %v94 = vunpack.c.l.b16 %v79
    %v95 = vpack.c.b16 %v92, %v91
    %v96 = vpack.c.b16 %v94, %v93
    %vm99 = vcmask 261120
    %v101 = vsel %vm99, %v60, 0
    %v104 = vsel %vm99, %v61, 0
    %v107 = vsel %vm99, %v62, 0
    %v110 = vsel %vm99, %v63, 0
    %v113 = vsel %vm99, %v64, 0
    %v116 = vsel %vm99, %v65, 0
    %v119 = vsel %vm99, %v66, 0
    %v122 = vsel %vm99, %v67, 0
    %v125 = vsel %vm99, %v68, 0
    %v128 = vsel %vm99, %v69, 0
    %v131 = vsel %vm99, %v70, 0
    %v134 = vsel %vm99, %v71, 0
    %v137 = vsel %vm99, %v72, 0
    %v140 = vsel %vm99, %v73, 0
    %v143 = vsel %vm99, %v74, 0
    %v146 = vsel %vm99, %v75, 0
    %148 = vmatprep.subr.bf16.mxu0 0
    %149 = vmatpush1.bf16.msra.mxu0 0
    %150 = vmatprep.subr.bf16.mxu0 0
    %151 = vmatpush1.bf16.msra.mxu0 0
    %152 = vmatprep.subr.bf16.mxu0 0
    %153 = vmatpush1.bf16.msra.mxu0 0
    %154 = vmatprep.subr.bf16.mxu0 0
    %155 = vmatpush1.bf16.msra.mxu0 0
    %156 = vmatprep.subr.bf16.mxu0 0
    %157 = vmatpush1.bf16.msra.mxu0 0
    %158 = vmatprep.subr.bf16.mxu0 0
    %159 = vmatpush1.bf16.msra.mxu0 0
    %160 = vmatprep.subr.bf16.mxu0 0
    %161 = vmatpush1.bf16.msra.mxu0 %v96
    %162 = vmatprep.subr.bf16.mxu0 0
    %163 = vmatpush1.bf16.msra.mxu0 %v95
    %164 = vmatprep.subr.bf16.mxu0 0
    %165 = vmatpush2.bf16.msra.mxu0 0
    %166 = vmatprep.subr.bf16.mxu0 0
    %167 = vmatpush2.bf16.msra.mxu0 0
    %168 = vmatprep.subr.bf16.mxu0 0
    %169 = vmatpush2.bf16.msra.mxu0 0
    %170 = vmatprep.subr.bf16.mxu0 0
    %171 = vmatpush2.bf16.msra.mxu0 0
    %172 = vmatprep.subr.bf16.mxu0 0
    %173 = vmatpush2.bf16.msra.mxu0 0
    %174 = vmatprep.subr.bf16.mxu0 0
    %175 = vmatpush2.bf16.msra.mxu0 0
    %176 = vmatprep.subr.bf16.mxu0 0
    %177 = vmatpush2.bf16.msra.mxu0 0
    %178 = vmatprep.subr.bf16.mxu0 0
    %179 = vmatpush2.bf16.msra.mxu0 0
    %180 = vmatprep.mubr.bf16.mxu0 0
    %181 = vmatmul.mubr.bf16.gmra.mxu0 %v101
    %v182 = vpop.f32.mrf.mxu0
    %v183 = vadd.f32 %v85, %v182
    %v184 = vpop.f32.mrf.mxu0
    %v185 = vpop.f32.mrf.mxu0
    %v186 = vadd.f32 %v85, %v185
    %v187 = vpop.f32.mrf.mxu0
    %188 = vmatprep.mubr.bf16.mxu0 0
    %189 = vmatmul.mubr.bf16.gmra.mxu0 %v104
    %v190 = vpop.f32.mrf.mxu0
    %v191 = vadd.f32 %v85, %v190
    %v192 = vpop.f32.mrf.mxu0
    %v193 = vpop.f32.mrf.mxu0
    %v194 = vadd.f32 %v85, %v193
    %v195 = vpop.f32.mrf.mxu0
    %196 = vmatprep.mubr.bf16.mxu0 0
    %197 = vmatmul.mubr.bf16.gmra.mxu0 %v107
    %v198 = vpop.f32.mrf.mxu0
    %v199 = vadd.f32 %v85, %v198
    %v200 = vpop.f32.mrf.mxu0
    %v201 = vpop.f32.mrf.mxu0
    %v202 = vadd.f32 %v85, %v201
    %v203 = vpop.f32.mrf.mxu0
    %204 = vmatprep.mubr.bf16.mxu0 0
    %205 = vmatmul.mubr.bf16.gmra.mxu0 %v110
    %v206 = vpop.f32.mrf.mxu0
    %v207 = vadd.f32 %v85, %v206
    %v208 = vpop.f32.mrf.mxu0
    %v209 = vpop.f32.mrf.mxu0
    %v210 = vadd.f32 %v85, %v209
    %v211 = vpop.f32.mrf.mxu0
    %212 = vmatprep.mubr.bf16.mxu0 0
    %213 = vmatmul.mubr.bf16.gmra.mxu0 %v113
    %v214 = vpop.f32.mrf.mxu0
    %v215 = vadd.f32 %v85, %v214
    %v216 = vpop.f32.mrf.mxu0
    %v217 = vpop.f32.mrf.mxu0
    %v218 = vadd.f32 %v85, %v217
    %v219 = vpop.f32.mrf.mxu0
    %220 = vmatprep.mubr.bf16.mxu0 0
    %221 = vmatmul.mubr.bf16.gmra.mxu0 %v116
    %v222 = vpop.f32.mrf.mxu0
    %v223 = vadd.f32 %v85, %v222
    %v224 = vpop.f32.mrf.mxu0
    %v225 = vpop.f32.mrf.mxu0
    %v226 = vadd.f32 %v85, %v225
    %v227 = vpop.f32.mrf.mxu0
    %228 = vmatprep.mubr.bf16.mxu0 0
    %229 = vmatmul.mubr.bf16.gmra.mxu0 %v119
    %v230 = vpop.f32.mrf.mxu0
    %v231 = vadd.f32 %v85, %v230
    %v232 = vpop.f32.mrf.mxu0
    %v233 = vpop.f32.mrf.mxu0
    %v234 = vadd.f32 %v85, %v233
    %v235 = vpop.f32.mrf.mxu0
    %236 = vmatprep.mubr.bf16.mxu0 0
    %237 = vmatmul.mubr.bf16.gmra.mxu0 %v122
    %v238 = vpop.f32.mrf.mxu0
    %v239 = vadd.f32 %v85, %v238
    %v240 = vpop.f32.mrf.mxu0
    %v241 = vpop.f32.mrf.mxu0
    %v242 = vadd.f32 %v85, %v241
    %v243 = vpop.f32.mrf.mxu0
    %244 = vmatprep.mubr.bf16.mxu0 0
    %245 = vmatmul.mubr.bf16.gmra.mxu0 %v125
    %v246 = vpop.f32.mrf.mxu0
    %v247 = vadd.f32 %v85, %v246
    %v248 = vpop.f32.mrf.mxu0
    %v249 = vpop.f32.mrf.mxu0
    %v250 = vadd.f32 %v85, %v249
    %v251 = vpop.f32.mrf.mxu0
    %252 = vmatprep.mubr.bf16.mxu0 0
    %253 = vmatmul.mubr.bf16.gmra.mxu0 %v128
    %v254 = vpop.f32.mrf.mxu0
    %v255 = vadd.f32 %v85, %v254
    %v256 = vpop.f32.mrf.mxu0
    %v257 = vpop.f32.mrf.mxu0
    %v258 = vadd.f32 %v85, %v257
    %v259 = vpop.f32.mrf.mxu0
    %260 = vmatprep.mubr.bf16.mxu0 0
    %261 = vmatmul.mubr.bf16.gmra.mxu0 %v131
    %v262 = vpop.f32.mrf.mxu0
    %v263 = vadd.f32 %v85, %v262
    %v264 = vpop.f32.mrf.mxu0
    %v265 = vpop.f32.mrf.mxu0
    %v266 = vadd.f32 %v85, %v265
    %v267 = vpop.f32.mrf.mxu0
    %268 = vmatprep.mubr.bf16.mxu0 0
    %269 = vmatmul.mubr.bf16.gmra.mxu0 %v134
    %v270 = vpop.f32.mrf.mxu0
    %v271 = vadd.f32 %v85, %v270
    %v272 = vpop.f32.mrf.mxu0
    %v273 = vpop.f32.mrf.mxu0
    %v274 = vadd.f32 %v85, %v273
    %v275 = vpop.f32.mrf.mxu0
    %276 = vmatprep.mubr.bf16.mxu0 0
    %277 = vmatmul.mubr.bf16.gmra.mxu0 %v137
    %v278 = vpop.f32.mrf.mxu0
    %v279 = vadd.f32 %v85, %v278
    %v280 = vpop.f32.mrf.mxu0
    %v281 = vpop.f32.mrf.mxu0
    %v282 = vadd.f32 %v85, %v281
    %v283 = vpop.f32.mrf.mxu0
    %284 = vmatprep.mubr.bf16.mxu0 0
    %285 = vmatmul.mubr.bf16.gmra.mxu0 %v140
    %v286 = vpop.f32.mrf.mxu0
    %v287 = vadd.f32 %v85, %v286
    %v288 = vpop.f32.mrf.mxu0
    %v289 = vpop.f32.mrf.mxu0
    %v290 = vadd.f32 %v85, %v289
    %v291 = vpop.f32.mrf.mxu0
    %292 = vmatprep.mubr.bf16.mxu0 0
    %293 = vmatmul.mubr.bf16.gmra.mxu0 %v143
    %v294 = vpop.f32.mrf.mxu0
    %v295 = vadd.f32 %v85, %v294
    %v296 = vpop.f32.mrf.mxu0
    %v297 = vpop.f32.mrf.mxu0
    %v298 = vadd.f32 %v85, %v297
    %v299 = vpop.f32.mrf.mxu0
    %300 = vmatprep.mubr.bf16.mxu0 0
    %301 = vmatmul.mubr.bf16.gmra.mxu0 %v146
    %v302 = vpop.f32.mrf.mxu0
    %v303 = vadd.f32 %v85, %v302
    %v304 = vpop.f32.mrf.mxu0
    %v305 = vpop.f32.mrf.mxu0
    %v306 = vadd.f32 %v85, %v305
    %v307 = vpop.f32.mrf.mxu0
    %308 = vdwg.mxu0
    %v309 = vmax.f32 %v183, 0.0
    %v310 = vmax.f32 %v186, 0.0
    %v311 = vmax.f32 %v191, 0.0
    %v312 = vmax.f32 %v194, 0.0
    %v313 = vmax.f32 %v199, 0.0
    %v314 = vmax.f32 %v202, 0.0
    %v315 = vmax.f32 %v207, 0.0
    %v316 = vmax.f32 %v210, 0.0
    %v317 = vmax.f32 %v215, 0.0
    %v318 = vmax.f32 %v218, 0.0
    %v319 = vmax.f32 %v223, 0.0
    %v320 = vmax.f32 %v226, 0.0
    %v321 = vmax.f32 %v231, 0.0
    %v322 = vmax.f32 %v234, 0.0
    %v323 = vmax.f32 %v239, 0.0
    %v324 = vmax.f32 %v242, 0.0
    %v325 = vmax.f32 %v247, 0.0
    %v326 = vmax.f32 %v250, 0.0
    %v327 = vmax.f32 %v255, 0.0
    %v328 = vmax.f32 %v258, 0.0
    %v329 = vmax.f32 %v263, 0.0
    %v330 = vmax.f32 %v266, 0.0
    %v331 = vmax.f32 %v271, 0.0
    %v332 = vmax.f32 %v274, 0.0
    %v333 = vmax.f32 %v279, 0.0
    %v334 = vmax.f32 %v282, 0.0
    %v335 = vmax.f32 %v287, 0.0
    %v336 = vmax.f32 %v290, 0.0
    %v337 = vmax.f32 %v295, 0.0
    %v338 = vmax.f32 %v298, 0.0
    %v339 = vmax.f32 %v303, 0.0
    %v340 = vmax.f32 %v306, 0.0
    %v341 = vpack.c.bf16 %v310, %v309
    %v342 = vpack.c.bf16 %v312, %v311
    %v343 = vpack.c.bf16 %v314, %v313
    %v344 = vpack.c.bf16 %v316, %v315
    %v345 = vpack.c.bf16 %v318, %v317
    %v346 = vpack.c.bf16 %v320, %v319
    %v347 = vpack.c.bf16 %v322, %v321
    %v348 = vpack.c.bf16 %v324, %v323
    %v349 = vpack.c.bf16 %v326, %v325
    %v350 = vpack.c.bf16 %v328, %v327
    %v351 = vpack.c.bf16 %v330, %v329
    %v352 = vpack.c.bf16 %v332, %v331
    %v353 = vpack.c.bf16 %v334, %v333
    %v354 = vpack.c.bf16 %v336, %v335
    %v355 = vpack.c.bf16 %v338, %v337
    %v356 = vpack.c.bf16 %v340, %v339
    %v357 = vld [vmem:[%s3] sm:$0xf]
    %v358 = vld [vmem:[%s3 + $0x4] sm:$0xf]
    %v359 = vld [vmem:[%s3 + $0x8] sm:$0xf]
    %v360 = vld [vmem:[%s3 + $0xc] sm:$0xf]
    %v361 = vld [vmem:[%s3 + $0x10] sm:$0xf]
    %v362 = vld [vmem:[%s3 + $0x14] sm:$0xf]
    %v363 = vld [vmem:[%s3 + $0x18] sm:$0xf]
    %v364 = vld [vmem:[%s3 + $0x1c] sm:$0xf]
    %v365 = vld [vmem:[%s3 + $0x20] sm:$0xf]
    %v366 = vld [vmem:[%s3 + $0x24] sm:$0xf]
    %v367 = vld [vmem:[%s3 + $0x28] sm:$0xf]
    %v368 = vld [vmem:[%s3 + $0x2c] sm:$0xf]
    %v369 = vld [vmem:[%s3 + $0x30] sm:$0xf]
    %v370 = vld [vmem:[%s3 + $0x34] sm:$0xf]
    %v371 = vld [vmem:[%s3 + $0x38] sm:$0xf]
    %v372 = vld [vmem:[%s3 + $0x3c] sm:$0xf]
    %v373 = vld [vmem:[%s4] sm:$0x1]
    %v375 = vlaneseq
    %v376 = vshrl.u32 %v375, 7
    %v377 = vsub.s32 0, %v376
    %v378 = vrot.slane %v373, %v377
    %v396 = vunpack.c.l.b16 %v357
    %v397 = vunpack.c.l.b16 %v358
    %v398 = vunpack.c.l.b16 %v359
    %v399 = vunpack.c.l.b16 %v360
    %v400 = vunpack.c.l.b16 %v361
    %v401 = vunpack.c.l.b16 %v362
    %v402 = vunpack.c.l.b16 %v363
    %v403 = vunpack.c.l.b16 %v364
    %v404 = vunpack.c.l.b16 %v365
    %v405 = vunpack.c.l.b16 %v366
    %v406 = vunpack.c.l.b16 %v367
    %v407 = vunpack.c.l.b16 %v368
    %v408 = vunpack.c.l.b16 %v369
    %v409 = vunpack.c.l.b16 %v370
    %v410 = vunpack.c.l.b16 %v371
    %v411 = vunpack.c.l.b16 %v372
    %v412 = vpack.c.b16 %v397, %v396
    %v413 = vpack.c.b16 %v399, %v398
    %v414 = vpack.c.b16 %v401, %v400
    %v415 = vpack.c.b16 %v403, %v402
    %v416 = vpack.c.b16 %v405, %v404
    %v417 = vpack.c.b16 %v407, %v406
    %v418 = vpack.c.b16 %v409, %v408
    %v419 = vpack.c.b16 %v411, %v410
    %428 = vmatprep.subr.bf16.mxu0 0
    %429 = vmatpush1.bf16.msra.mxu0 %v419
    %430 = vmatprep.subr.bf16.mxu0 0
    %431 = vmatpush1.bf16.msra.mxu0 %v418
    %432 = vmatprep.subr.bf16.mxu0 0
    %433 = vmatpush1.bf16.msra.mxu0 %v417
    %434 = vmatprep.subr.bf16.mxu0 0
    %435 = vmatpush1.bf16.msra.mxu0 %v416
    %436 = vmatprep.subr.bf16.mxu0 0
    %437 = vmatpush1.bf16.msra.mxu0 %v415
    %438 = vmatprep.subr.bf16.mxu0 0
    %439 = vmatpush1.bf16.msra.mxu0 %v414
    %440 = vmatprep.subr.bf16.mxu0 0
    %441 = vmatpush1.bf16.msra.mxu0 %v413
    %442 = vmatprep.subr.bf16.mxu0 0
    %443 = vmatpush1.bf16.msra.mxu0 %v412
    %444 = vmatprep.subr.bf16.mxu0 0
    %445 = vmatpush2.bf16.msra.mxu0 0
    %446 = vmatprep.subr.bf16.mxu0 0
    %447 = vmatpush2.bf16.msra.mxu0 0
    %448 = vmatprep.subr.bf16.mxu0 0
    %449 = vmatpush2.bf16.msra.mxu0 0
    %450 = vmatprep.subr.bf16.mxu0 0
    %451 = vmatpush2.bf16.msra.mxu0 0
    %452 = vmatprep.subr.bf16.mxu0 0
    %453 = vmatpush2.bf16.msra.mxu0 0
    %454 = vmatprep.subr.bf16.mxu0 0
    %455 = vmatpush2.bf16.msra.mxu0 0
    %456 = vmatprep.subr.bf16.mxu0 0
    %457 = vmatpush2.bf16.msra.mxu0 0
    %458 = vmatprep.subr.bf16.mxu0 0
    %459 = vmatpush2.bf16.msra.mxu0 0
    %460 = vmatprep.mubr.bf16.mxu0 0
    %461 = vmatmul.mubr.bf16.gmra.mxu0 %v341
    %v462 = vpop.f32.mrf.mxu0
    %v463 = vadd.f32 %v378, %v462
    %v464 = vpop.f32.mrf.mxu0
    %v465 = vpop.f32.mrf.mxu0
    %v466 = vadd.f32 %v378, %v465
    %v467 = vpop.f32.mrf.mxu0
    %468 = vmatprep.mubr.bf16.mxu0 0
    %469 = vmatmul.mubr.bf16.gmra.mxu0 %v342
    %v470 = vpop.f32.mrf.mxu0
    %v471 = vadd.f32 %v378, %v470
    %v472 = vpop.f32.mrf.mxu0
    %v473 = vpop.f32.mrf.mxu0
    %v474 = vadd.f32 %v378, %v473
    %v475 = vpop.f32.mrf.mxu0
    %476 = vmatprep.mubr.bf16.mxu0 0
    %477 = vmatmul.mubr.bf16.gmra.mxu0 %v343
    %v478 = vpop.f32.mrf.mxu0
    %v479 = vadd.f32 %v378, %v478
    %v480 = vpop.f32.mrf.mxu0
    %v481 = vpop.f32.mrf.mxu0
    %v482 = vadd.f32 %v378, %v481
    %v483 = vpop.f32.mrf.mxu0
    %484 = vmatprep.mubr.bf16.mxu0 0
    %485 = vmatmul.mubr.bf16.gmra.mxu0 %v344
    %v486 = vpop.f32.mrf.mxu0
    %v487 = vadd.f32 %v378, %v486
    %v488 = vpop.f32.mrf.mxu0
    %v489 = vpop.f32.mrf.mxu0
    %v490 = vadd.f32 %v378, %v489
    %v491 = vpop.f32.mrf.mxu0
    %492 = vmatprep.mubr.bf16.mxu0 0
    %493 = vmatmul.mubr.bf16.gmra.mxu0 %v345
    %v494 = vpop.f32.mrf.mxu0
    %v495 = vadd.f32 %v378, %v494
    %v496 = vpop.f32.mrf.mxu0
    %v497 = vpop.f32.mrf.mxu0
    %v498 = vadd.f32 %v378, %v497
    %v499 = vpop.f32.mrf.mxu0
    %500 = vmatprep.mubr.bf16.mxu0 0
    %501 = vmatmul.mubr.bf16.gmra.mxu0 %v346
    %v502 = vpop.f32.mrf.mxu0
    %v503 = vadd.f32 %v378, %v502
    %v504 = vpop.f32.mrf.mxu0
    %v505 = vpop.f32.mrf.mxu0
    %v506 = vadd.f32 %v378, %v505
    %v507 = vpop.f32.mrf.mxu0
    %508 = vmatprep.mubr.bf16.mxu0 0
    %509 = vmatmul.mubr.bf16.gmra.mxu0 %v347
    %v510 = vpop.f32.mrf.mxu0
    %v511 = vadd.f32 %v378, %v510
    %v512 = vpop.f32.mrf.mxu0
    %v513 = vpop.f32.mrf.mxu0
    %v514 = vadd.f32 %v378, %v513
    %v515 = vpop.f32.mrf.mxu0
    %516 = vmatprep.mubr.bf16.mxu0 0
    %517 = vmatmul.mubr.bf16.gmra.mxu0 %v348
    %v518 = vpop.f32.mrf.mxu0
    %v519 = vadd.f32 %v378, %v518
    %v520 = vpop.f32.mrf.mxu0
    %v521 = vpop.f32.mrf.mxu0
    %v522 = vadd.f32 %v378, %v521
    %v523 = vpop.f32.mrf.mxu0
    %524 = vmatprep.mubr.bf16.mxu0 0
    %525 = vmatmul.mubr.bf16.gmra.mxu0 %v349
    %v526 = vpop.f32.mrf.mxu0
    %v527 = vadd.f32 %v378, %v526
    %v528 = vpop.f32.mrf.mxu0
    %v529 = vpop.f32.mrf.mxu0
    %v530 = vadd.f32 %v378, %v529
    %v531 = vpop.f32.mrf.mxu0
    %532 = vmatprep.mubr.bf16.mxu0 0
    %533 = vmatmul.mubr.bf16.gmra.mxu0 %v350
    %v534 = vpop.f32.mrf.mxu0
    %v535 = vadd.f32 %v378, %v534
    %v536 = vpop.f32.mrf.mxu0
    %v537 = vpop.f32.mrf.mxu0
    %v538 = vadd.f32 %v378, %v537
    %v539 = vpop.f32.mrf.mxu0
    %540 = vmatprep.mubr.bf16.mxu0 0
    %541 = vmatmul.mubr.bf16.gmra.mxu0 %v351
    %v542 = vpop.f32.mrf.mxu0
    %v543 = vadd.f32 %v378, %v542
    %v544 = vpop.f32.mrf.mxu0
    %v545 = vpop.f32.mrf.mxu0
    %v546 = vadd.f32 %v378, %v545
    %v547 = vpop.f32.mrf.mxu0
    %548 = vmatprep.mubr.bf16.mxu0 0
    %549 = vmatmul.mubr.bf16.gmra.mxu0 %v352
    %v550 = vpop.f32.mrf.mxu0
    %v551 = vadd.f32 %v378, %v550
    %v552 = vpop.f32.mrf.mxu0
    %v553 = vpop.f32.mrf.mxu0
    %v554 = vadd.f32 %v378, %v553
    %v555 = vpop.f32.mrf.mxu0
    %556 = vmatprep.mubr.bf16.mxu0 0
    %557 = vmatmul.mubr.bf16.gmra.mxu0 %v353
    %v558 = vpop.f32.mrf.mxu0
    %v559 = vadd.f32 %v378, %v558
    %v560 = vpop.f32.mrf.mxu0
    %v561 = vpop.f32.mrf.mxu0
    %v562 = vadd.f32 %v378, %v561
    %v563 = vpop.f32.mrf.mxu0
    %564 = vmatprep.mubr.bf16.mxu0 0
    %565 = vmatmul.mubr.bf16.gmra.mxu0 %v354
    %v566 = vpop.f32.mrf.mxu0
    %v567 = vadd.f32 %v378, %v566
    %v568 = vpop.f32.mrf.mxu0
    %v569 = vpop.f32.mrf.mxu0
    %v570 = vadd.f32 %v378, %v569
    %v571 = vpop.f32.mrf.mxu0
    %572 = vmatprep.mubr.bf16.mxu0 0
    %573 = vmatmul.mubr.bf16.gmra.mxu0 %v355
    %v574 = vpop.f32.mrf.mxu0
    %v575 = vadd.f32 %v378, %v574
    %v576 = vpop.f32.mrf.mxu0
    %v577 = vpop.f32.mrf.mxu0
    %v578 = vadd.f32 %v378, %v577
    %v579 = vpop.f32.mrf.mxu0
    %580 = vmatprep.mubr.bf16.mxu0 0
    %581 = vmatmul.mubr.bf16.gmra.mxu0 %v356
    %v582 = vpop.f32.mrf.mxu0
    %v583 = vadd.f32 %v378, %v582
    %v584 = vpop.f32.mrf.mxu0
    %v585 = vpop.f32.mrf.mxu0
    %v586 = vadd.f32 %v378, %v585
    %v587 = vpop.f32.mrf.mxu0
    %588 = vdwg.mxu0
    %v589 = vmax.f32 %v463, 0.0
    %v590 = vmax.f32 %v466, 0.0
    %v591 = vmax.f32 %v471, 0.0
    %v592 = vmax.f32 %v474, 0.0
    %v593 = vmax.f32 %v479, 0.0
    %v594 = vmax.f32 %v482, 0.0
    %v595 = vmax.f32 %v487, 0.0
    %v596 = vmax.f32 %v490, 0.0
    %v597 = vmax.f32 %v495, 0.0
    %v598 = vmax.f32 %v498, 0.0
    %v599 = vmax.f32 %v503, 0.0
    %v600 = vmax.f32 %v506, 0.0
    %v601 = vmax.f32 %v511, 0.0
    %v602 = vmax.f32 %v514, 0.0
    %v603 = vmax.f32 %v519, 0.0
    %v604 = vmax.f32 %v522, 0.0
    %v605 = vmax.f32 %v527, 0.0
    %v606 = vmax.f32 %v530, 0.0
    %v607 = vmax.f32 %v535, 0.0
    %v608 = vmax.f32 %v538, 0.0
    %v609 = vmax.f32 %v543, 0.0
    %v610 = vmax.f32 %v546, 0.0
    %v611 = vmax.f32 %v551, 0.0
    %v612 = vmax.f32 %v554, 0.0
    %v613 = vmax.f32 %v559, 0.0
    %v614 = vmax.f32 %v562, 0.0
    %v615 = vmax.f32 %v567, 0.0
    %v616 = vmax.f32 %v570, 0.0
    %v617 = vmax.f32 %v575, 0.0
    %v618 = vmax.f32 %v578, 0.0
    %v619 = vmax.f32 %v583, 0.0
    %v620 = vmax.f32 %v586, 0.0
    %v621 = vpack.c.bf16 %v590, %v589
    %v622 = vpack.c.bf16 %v592, %v591
    %v623 = vpack.c.bf16 %v594, %v593
    %v624 = vpack.c.bf16 %v596, %v595
    %v625 = vpack.c.bf16 %v598, %v597
    %v626 = vpack.c.bf16 %v600, %v599
    %v627 = vpack.c.bf16 %v602, %v601
    %v628 = vpack.c.bf16 %v604, %v603
    %v629 = vpack.c.bf16 %v606, %v605
    %v630 = vpack.c.bf16 %v608, %v607
    %v631 = vpack.c.bf16 %v610, %v609
    %v632 = vpack.c.bf16 %v612, %v611
    %v633 = vpack.c.bf16 %v614, %v613
    %v634 = vpack.c.bf16 %v616, %v615
    %v635 = vpack.c.bf16 %v618, %v617
    %v636 = vpack.c.bf16 %v620, %v619
    %v637 = vld [vmem:[%s5] sm:$0xf]
    %v638 = vld [vmem:[%s5 + $0x4] sm:$0xf]
    %v639 = vld [vmem:[%s5 + $0x8] sm:$0xf]
    %v640 = vld [vmem:[%s5 + $0xc] sm:$0xf]
    %v641 = vld [vmem:[%s5 + $0x10] sm:$0xf]
    %v642 = vld [vmem:[%s5 + $0x14] sm:$0xf]
    %v643 = vld [vmem:[%s5 + $0x18] sm:$0xf]
    %v644 = vld [vmem:[%s5 + $0x1c] sm:$0xf]
    %v645 = vld [vmem:[%s5 + $0x20] sm:$0xf]
    %v646 = vld [vmem:[%s5 + $0x24] sm:$0xf]
    %v647 = vld [vmem:[%s5 + $0x28] sm:$0xf]
    %v648 = vld [vmem:[%s5 + $0x2c] sm:$0xf]
    %v649 = vld [vmem:[%s5 + $0x30] sm:$0xf]
    %v650 = vld [vmem:[%s5 + $0x34] sm:$0xf]
    %v651 = vld [vmem:[%s5 + $0x38] sm:$0xf]
    %v652 = vld [vmem:[%s5 + $0x3c] sm:$0xf]
    %v653 = vld [vmem:[%s6] sm:$0x1]
    %v655 = vlaneseq
    %v656 = vshrl.u32 %v655, 7
    %v657 = vsub.s32 0, %v656
    %v658 = vrot.slane %v653, %v657
    %v676 = vunpack.c.l.b16 %v637
    %v677 = vunpack.c.l.b16 %v638
    %v678 = vunpack.c.l.b16 %v639
    %v679 = vunpack.c.l.b16 %v640
    %v680 = vunpack.c.l.b16 %v641
    %v681 = vunpack.c.l.b16 %v642
    %v682 = vunpack.c.l.b16 %v643
    %v683 = vunpack.c.l.b16 %v644
    %v684 = vunpack.c.l.b16 %v645
    %v685 = vunpack.c.l.b16 %v646
    %v686 = vunpack.c.l.b16 %v647
    %v687 = vunpack.c.l.b16 %v648
    %v688 = vunpack.c.l.b16 %v649
    %v689 = vunpack.c.l.b16 %v650
    %v690 = vunpack.c.l.b16 %v651
    %v691 = vunpack.c.l.b16 %v652
    %v692 = vpack.c.b16 %v677, %v676
    %v693 = vpack.c.b16 %v679, %v678
    %v694 = vpack.c.b16 %v681, %v680
    %v695 = vpack.c.b16 %v683, %v682
    %v696 = vpack.c.b16 %v685, %v684
    %v697 = vpack.c.b16 %v687, %v686
    %v698 = vpack.c.b16 %v689, %v688
    %v699 = vpack.c.b16 %v691, %v690
    %708 = vmatprep.subr.bf16.mxu0 0
    %709 = vmatpush1.bf16.msra.mxu0 %v699
    %710 = vmatprep.subr.bf16.mxu0 0
    %711 = vmatpush1.bf16.msra.mxu0 %v698
    %712 = vmatprep.subr.bf16.mxu0 0
    %713 = vmatpush1.bf16.msra.mxu0 %v697
    %714 = vmatprep.subr.bf16.mxu0 0
    %715 = vmatpush1.bf16.msra.mxu0 %v696
    %716 = vmatprep.subr.bf16.mxu0 0
    %717 = vmatpush1.bf16.msra.mxu0 %v695
    %718 = vmatprep.subr.bf16.mxu0 0
    %719 = vmatpush1.bf16.msra.mxu0 %v694
    %720 = vmatprep.subr.bf16.mxu0 0
    %721 = vmatpush1.bf16.msra.mxu0 %v693
    %722 = vmatprep.subr.bf16.mxu0 0
    %723 = vmatpush1.bf16.msra.mxu0 %v692
    %724 = vmatprep.subr.bf16.mxu0 0
    %725 = vmatpush2.bf16.msra.mxu0 0
    %726 = vmatprep.subr.bf16.mxu0 0
    %727 = vmatpush2.bf16.msra.mxu0 0
    %728 = vmatprep.subr.bf16.mxu0 0
    %729 = vmatpush2.bf16.msra.mxu0 0
    %730 = vmatprep.subr.bf16.mxu0 0
    %731 = vmatpush2.bf16.msra.mxu0 0
    %732 = vmatprep.subr.bf16.mxu0 0
    %733 = vmatpush2.bf16.msra.mxu0 0
    %734 = vmatprep.subr.bf16.mxu0 0
    %735 = vmatpush2.bf16.msra.mxu0 0
    %736 = vmatprep.subr.bf16.mxu0 0
    %737 = vmatpush2.bf16.msra.mxu0 0
    %738 = vmatprep.subr.bf16.mxu0 0
    %739 = vmatpush2.bf16.msra.mxu0 0
    %740 = vmatprep.mubr.bf16.mxu0 0
    %741 = vmatmul.mubr.bf16.gmra.mxu0 %v621
    %v742 = vpop.f32.mrf.mxu0
    %v743 = vadd.f32 %v658, %v742
    %v744 = vpop.f32.mrf.mxu0
    %v745 = vpop.f32.mrf.mxu0
    %v746 = vadd.f32 %v658, %v745
    %v747 = vpop.f32.mrf.mxu0
    %748 = vmatprep.mubr.bf16.mxu0 0
    %749 = vmatmul.mubr.bf16.gmra.mxu0 %v622
    %v750 = vpop.f32.mrf.mxu0
    %v751 = vadd.f32 %v658, %v750
    %v752 = vpop.f32.mrf.mxu0
    %v753 = vpop.f32.mrf.mxu0
    %v754 = vadd.f32 %v658, %v753
    %v755 = vpop.f32.mrf.mxu0
    %756 = vmatprep.mubr.bf16.mxu0 0
    %757 = vmatmul.mubr.bf16.gmra.mxu0 %v623
    %v758 = vpop.f32.mrf.mxu0
    %v759 = vadd.f32 %v658, %v758
    %v760 = vpop.f32.mrf.mxu0
    %v761 = vpop.f32.mrf.mxu0
    %v762 = vadd.f32 %v658, %v761
    %v763 = vpop.f32.mrf.mxu0
    %764 = vmatprep.mubr.bf16.mxu0 0
    %765 = vmatmul.mubr.bf16.gmra.mxu0 %v624
    %v766 = vpop.f32.mrf.mxu0
    %v767 = vadd.f32 %v658, %v766
    %v768 = vpop.f32.mrf.mxu0
    %v769 = vpop.f32.mrf.mxu0
    %v770 = vadd.f32 %v658, %v769
    %v771 = vpop.f32.mrf.mxu0
    %772 = vmatprep.mubr.bf16.mxu0 0
    %773 = vmatmul.mubr.bf16.gmra.mxu0 %v625
    %v774 = vpop.f32.mrf.mxu0
    %v775 = vadd.f32 %v658, %v774
    %v776 = vpop.f32.mrf.mxu0
    %v777 = vpop.f32.mrf.mxu0
    %v778 = vadd.f32 %v658, %v777
    %v779 = vpop.f32.mrf.mxu0
    %780 = vmatprep.mubr.bf16.mxu0 0
    %781 = vmatmul.mubr.bf16.gmra.mxu0 %v626
    %v782 = vpop.f32.mrf.mxu0
    %v783 = vadd.f32 %v658, %v782
    %v784 = vpop.f32.mrf.mxu0
    %v785 = vpop.f32.mrf.mxu0
    %v786 = vadd.f32 %v658, %v785
    %v787 = vpop.f32.mrf.mxu0
    %788 = vmatprep.mubr.bf16.mxu0 0
    %789 = vmatmul.mubr.bf16.gmra.mxu0 %v627
    %v790 = vpop.f32.mrf.mxu0
    %v791 = vadd.f32 %v658, %v790
    %v792 = vpop.f32.mrf.mxu0
    %v793 = vpop.f32.mrf.mxu0
    %v794 = vadd.f32 %v658, %v793
    %v795 = vpop.f32.mrf.mxu0
    %796 = vmatprep.mubr.bf16.mxu0 0
    %797 = vmatmul.mubr.bf16.gmra.mxu0 %v628
    %v798 = vpop.f32.mrf.mxu0
    %v799 = vadd.f32 %v658, %v798
    %v800 = vpop.f32.mrf.mxu0
    %v801 = vpop.f32.mrf.mxu0
    %v802 = vadd.f32 %v658, %v801
    %v803 = vpop.f32.mrf.mxu0
    %804 = vmatprep.mubr.bf16.mxu0 0
    %805 = vmatmul.mubr.bf16.gmra.mxu0 %v629
    %v806 = vpop.f32.mrf.mxu0
    %v807 = vadd.f32 %v658, %v806
    %v808 = vpop.f32.mrf.mxu0
    %v809 = vpop.f32.mrf.mxu0
    %v810 = vadd.f32 %v658, %v809
    %v811 = vpop.f32.mrf.mxu0
    %812 = vmatprep.mubr.bf16.mxu0 0
    %813 = vmatmul.mubr.bf16.gmra.mxu0 %v630
    %v814 = vpop.f32.mrf.mxu0
    %v815 = vadd.f32 %v658, %v814
    %v816 = vpop.f32.mrf.mxu0
    %v817 = vpop.f32.mrf.mxu0
    %v818 = vadd.f32 %v658, %v817
    %v819 = vpop.f32.mrf.mxu0
    %820 = vmatprep.mubr.bf16.mxu0 0
    %821 = vmatmul.mubr.bf16.gmra.mxu0 %v631
    %v822 = vpop.f32.mrf.mxu0
    %v823 = vadd.f32 %v658, %v822
    %v824 = vpop.f32.mrf.mxu0
    %v825 = vpop.f32.mrf.mxu0
    %v826 = vadd.f32 %v658, %v825
    %v827 = vpop.f32.mrf.mxu0
    %828 = vmatprep.mubr.bf16.mxu0 0
    %829 = vmatmul.mubr.bf16.gmra.mxu0 %v632
    %v830 = vpop.f32.mrf.mxu0
    %v831 = vadd.f32 %v658, %v830
    %v832 = vpop.f32.mrf.mxu0
    %v833 = vpop.f32.mrf.mxu0
    %v834 = vadd.f32 %v658, %v833
    %v835 = vpop.f32.mrf.mxu0
    %836 = vmatprep.mubr.bf16.mxu0 0
    %837 = vmatmul.mubr.bf16.gmra.mxu0 %v633
    %v838 = vpop.f32.mrf.mxu0
    %v839 = vadd.f32 %v658, %v838
    %v840 = vpop.f32.mrf.mxu0
    %v841 = vpop.f32.mrf.mxu0
    %v842 = vadd.f32 %v658, %v841
    %v843 = vpop.f32.mrf.mxu0
    %844 = vmatprep.mubr.bf16.mxu0 0
    %845 = vmatmul.mubr.bf16.gmra.mxu0 %v634
    %v846 = vpop.f32.mrf.mxu0
    %v847 = vadd.f32 %v658, %v846
    %v848 = vpop.f32.mrf.mxu0
    %v849 = vpop.f32.mrf.mxu0
    %v850 = vadd.f32 %v658, %v849
    %v851 = vpop.f32.mrf.mxu0
    %852 = vmatprep.mubr.bf16.mxu0 0
    %853 = vmatmul.mubr.bf16.gmra.mxu0 %v635
    %v854 = vpop.f32.mrf.mxu0
    %v855 = vadd.f32 %v658, %v854
    %v856 = vpop.f32.mrf.mxu0
    %v857 = vpop.f32.mrf.mxu0
    %v858 = vadd.f32 %v658, %v857
    %v859 = vpop.f32.mrf.mxu0
    %860 = vmatprep.mubr.bf16.mxu0 0
    %861 = vmatmul.mubr.bf16.gmra.mxu0 %v636
    %v862 = vpop.f32.mrf.mxu0
    %v863 = vadd.f32 %v658, %v862
    %v864 = vpop.f32.mrf.mxu0
    %v865 = vpop.f32.mrf.mxu0
    %v866 = vadd.f32 %v658, %v865
    %v867 = vpop.f32.mrf.mxu0
    %868 = vdwg.mxu0
    %v869 = vlaneseq
    %v870 = vand.u32 %v869, 127
    %vm871 = vcmp.lt.s32.totalorder %v870, 8
    %v872 = vsel %vm871, %v743, -1e+30
    %v873 = vsel %vm871, %v746, -1e+30
    %v874 = vsel %vm871, %v751, -1e+30
    %v875 = vsel %vm871, %v754, -1e+30
    %v876 = vsel %vm871, %v759, -1e+30
    %v877 = vsel %vm871, %v762, -1e+30
    %v878 = vsel %vm871, %v767, -1e+30
    %v879 = vsel %vm871, %v770, -1e+30
    %v880 = vsel %vm871, %v775, -1e+30
    %v881 = vsel %vm871, %v778, -1e+30
    %v882 = vsel %vm871, %v783, -1e+30
    %v883 = vsel %vm871, %v786, -1e+30
    %v884 = vsel %vm871, %v791, -1e+30
    %v885 = vsel %vm871, %v794, -1e+30
    %v886 = vsel %vm871, %v799, -1e+30
    %v887 = vsel %vm871, %v802, -1e+30
    %v888 = vsel %vm871, %v807, -1e+30
    %v889 = vsel %vm871, %v810, -1e+30
    %v890 = vsel %vm871, %v815, -1e+30
    %v891 = vsel %vm871, %v818, -1e+30
    %v892 = vsel %vm871, %v823, -1e+30
    %v893 = vsel %vm871, %v826, -1e+30
    %v894 = vsel %vm871, %v831, -1e+30
    %v895 = vsel %vm871, %v834, -1e+30
    %v896 = vsel %vm871, %v839, -1e+30
    %v897 = vsel %vm871, %v842, -1e+30
    %v898 = vsel %vm871, %v847, -1e+30
    %v899 = vsel %vm871, %v850, -1e+30
    %v900 = vsel %vm871, %v855, -1e+30
    %v901 = vsel %vm871, %v858, -1e+30
    %v902 = vsel %vm871, %v863, -1e+30
    %v903 = vsel %vm871, %v866, -1e+30
    %904 = vmax.xlane.f32.xlu0 %v872
    %v905 = vpop.xlane.xlu0 %904
    %906 = vmax.xlane.f32.xlu0 %v873
    %v907 = vpop.xlane.xlu0 %906
    %908 = vmax.xlane.f32.xlu0 %v874
    %v909 = vpop.xlane.xlu0 %908
    %910 = vmax.xlane.f32.xlu0 %v875
    %v911 = vpop.xlane.xlu0 %910
    %912 = vmax.xlane.f32.xlu0 %v876
    %v913 = vpop.xlane.xlu0 %912
    %914 = vmax.xlane.f32.xlu0 %v877
    %v915 = vpop.xlane.xlu0 %914
    %916 = vmax.xlane.f32.xlu0 %v878
    %v917 = vpop.xlane.xlu0 %916
    %918 = vmax.xlane.f32.xlu0 %v879
    %v919 = vpop.xlane.xlu0 %918
    %920 = vmax.xlane.f32.xlu0 %v880
    %v921 = vpop.xlane.xlu0 %920
    %922 = vmax.xlane.f32.xlu0 %v881
    %v923 = vpop.xlane.xlu0 %922
    %924 = vmax.xlane.f32.xlu0 %v882
    %v925 = vpop.xlane.xlu0 %924
    %926 = vmax.xlane.f32.xlu0 %v883
    %v927 = vpop.xlane.xlu0 %926
    %928 = vmax.xlane.f32.xlu0 %v884
    %v929 = vpop.xlane.xlu0 %928
    %930 = vmax.xlane.f32.xlu0 %v885
    %v931 = vpop.xlane.xlu0 %930
    %932 = vmax.xlane.f32.xlu0 %v886
    %v933 = vpop.xlane.xlu0 %932
    %934 = vmax.xlane.f32.xlu0 %v887
    %v935 = vpop.xlane.xlu0 %934
    %936 = vmax.xlane.f32.xlu0 %v888
    %v937 = vpop.xlane.xlu0 %936
    %938 = vmax.xlane.f32.xlu0 %v889
    %v939 = vpop.xlane.xlu0 %938
    %940 = vmax.xlane.f32.xlu0 %v890
    %v941 = vpop.xlane.xlu0 %940
    %942 = vmax.xlane.f32.xlu0 %v891
    %v943 = vpop.xlane.xlu0 %942
    %944 = vmax.xlane.f32.xlu0 %v892
    %v945 = vpop.xlane.xlu0 %944
    %946 = vmax.xlane.f32.xlu0 %v893
    %v947 = vpop.xlane.xlu0 %946
    %948 = vmax.xlane.f32.xlu0 %v894
    %v949 = vpop.xlane.xlu0 %948
    %950 = vmax.xlane.f32.xlu0 %v895
    %v951 = vpop.xlane.xlu0 %950
    %952 = vmax.xlane.f32.xlu0 %v896
    %v953 = vpop.xlane.xlu0 %952
    %954 = vmax.xlane.f32.xlu0 %v897
    %v955 = vpop.xlane.xlu0 %954
    %956 = vmax.xlane.f32.xlu0 %v898
    %v957 = vpop.xlane.xlu0 %956
    %958 = vmax.xlane.f32.xlu0 %v899
    %v959 = vpop.xlane.xlu0 %958
    %960 = vmax.xlane.f32.xlu0 %v900
    %v961 = vpop.xlane.xlu0 %960
    %962 = vmax.xlane.f32.xlu0 %v901
    %v963 = vpop.xlane.xlu0 %962
    %964 = vmax.xlane.f32.xlu0 %v902
    %v965 = vpop.xlane.xlu0 %964
    %966 = vmax.xlane.f32.xlu0 %v903
    %v967 = vpop.xlane.xlu0 %966
    %v968 = vsub.f32 %v872, %v905
    %v969 = vsub.f32 %v873, %v907
    %v970 = vsub.f32 %v874, %v909
    %v971 = vsub.f32 %v875, %v911
    %v972 = vsub.f32 %v876, %v913
    %v973 = vsub.f32 %v877, %v915
    %v974 = vsub.f32 %v878, %v917
    %v975 = vsub.f32 %v879, %v919
    %v976 = vsub.f32 %v880, %v921
    %v977 = vsub.f32 %v881, %v923
    %v978 = vsub.f32 %v882, %v925
    %v979 = vsub.f32 %v883, %v927
    %v980 = vsub.f32 %v884, %v929
    %v981 = vsub.f32 %v885, %v931
    %v982 = vsub.f32 %v886, %v933
    %v983 = vsub.f32 %v887, %v935
    %v984 = vsub.f32 %v888, %v937
    %v985 = vsub.f32 %v889, %v939
    %v986 = vsub.f32 %v890, %v941
    %v987 = vsub.f32 %v891, %v943
    %v988 = vsub.f32 %v892, %v945
    %v989 = vsub.f32 %v893, %v947
    %v990 = vsub.f32 %v894, %v949
    %v991 = vsub.f32 %v895, %v951
    %v992 = vsub.f32 %v896, %v953
    %v993 = vsub.f32 %v897, %v955
    %v994 = vsub.f32 %v898, %v957
    %v995 = vsub.f32 %v899, %v959
    %v996 = vsub.f32 %v900, %v961
    %v997 = vsub.f32 %v901, %v963
    %v998 = vsub.f32 %v902, %v965
    %v999 = vsub.f32 %v903, %v967
    %v1000 = vmul.f32 %v968, 1.442695
    %v1001 = vpow.pop %v1000
    %v1002 = vmul.f32 %v969, 1.442695
    %v1003 = vpow.pop %v1002
    %v1004 = vmul.f32 %v970, 1.442695
    %v1005 = vpow.pop %v1004
    %v1006 = vmul.f32 %v971, 1.442695
    %v1007 = vpow.pop %v1006
    %v1008 = vmul.f32 %v972, 1.442695
    %v1009 = vpow.pop %v1008
    %v1010 = vmul.f32 %v973, 1.442695
    %v1011 = vpow.pop %v1010
    %v1012 = vmul.f32 %v974, 1.442695
    %v1013 = vpow.pop %v1012
    %v1014 = vmul.f32 %v975, 1.442695
    %v1015 = vpow.pop %v1014
    %v1016 = vmul.f32 %v976, 1.442695
    %v1017 = vpow.pop %v1016
    %v1018 = vmul.f32 %v977, 1.442695
    %v1019 = vpow.pop %v1018
    %v1020 = vmul.f32 %v978, 1.442695
    %v1021 = vpow.pop %v1020
    %v1022 = vmul.f32 %v979, 1.442695
    %v1023 = vpow.pop %v1022
    %v1024 = vmul.f32 %v980, 1.442695
    %v1025 = vpow.pop %v1024
    %v1026 = vmul.f32 %v981, 1.442695
    %v1027 = vpow.pop %v1026
    %v1028 = vmul.f32 %v982, 1.442695
    %v1029 = vpow.pop %v1028
    %v1030 = vmul.f32 %v983, 1.442695
    %v1031 = vpow.pop %v1030
    %v1032 = vmul.f32 %v984, 1.442695
    %v1033 = vpow.pop %v1032
    %v1034 = vmul.f32 %v985, 1.442695
    %v1035 = vpow.pop %v1034
    %v1036 = vmul.f32 %v986, 1.442695
    %v1037 = vpow.pop %v1036
    %v1038 = vmul.f32 %v987, 1.442695
    %v1039 = vpow.pop %v1038
    %v1040 = vmul.f32 %v988, 1.442695
    %v1041 = vpow.pop %v1040
    %v1042 = vmul.f32 %v989, 1.442695
    %v1043 = vpow.pop %v1042
    %v1044 = vmul.f32 %v990, 1.442695
    %v1045 = vpow.pop %v1044
    %v1046 = vmul.f32 %v991, 1.442695
    %v1047 = vpow.pop %v1046
    %v1048 = vmul.f32 %v992, 1.442695
    %v1049 = vpow.pop %v1048
    %v1050 = vmul.f32 %v993, 1.442695
    %v1051 = vpow.pop %v1050
    %v1052 = vmul.f32 %v994, 1.442695
    %v1053 = vpow.pop %v1052
    %v1054 = vmul.f32 %v995, 1.442695
    %v1055 = vpow.pop %v1054
    %v1056 = vmul.f32 %v996, 1.442695
    %v1057 = vpow.pop %v1056
    %v1058 = vmul.f32 %v997, 1.442695
    %v1059 = vpow.pop %v1058
    %v1060 = vmul.f32 %v998, 1.442695
    %v1061 = vpow.pop %v1060
    %v1062 = vmul.f32 %v999, 1.442695
    %v1063 = vpow.pop %v1062
    %1064 = vadd.xlane.f32.xlu0 %v1001
    %v1065 = vpop.xlane.xlu0 %1064
    %1066 = vadd.xlane.f32.xlu0 %v1003
    %v1067 = vpop.xlane.xlu0 %1066
    %1068 = vadd.xlane.f32.xlu0 %v1005
    %v1069 = vpop.xlane.xlu0 %1068
    %1070 = vadd.xlane.f32.xlu0 %v1007
    %v1071 = vpop.xlane.xlu0 %1070
    %1072 = vadd.xlane.f32.xlu0 %v1009
    %v1073 = vpop.xlane.xlu0 %1072
    %1074 = vadd.xlane.f32.xlu0 %v1011
    %v1075 = vpop.xlane.xlu0 %1074
    %1076 = vadd.xlane.f32.xlu0 %v1013
    %v1077 = vpop.xlane.xlu0 %1076
    %1078 = vadd.xlane.f32.xlu0 %v1015
    %v1079 = vpop.xlane.xlu0 %1078
    %1080 = vadd.xlane.f32.xlu0 %v1017
    %v1081 = vpop.xlane.xlu0 %1080
    %1082 = vadd.xlane.f32.xlu0 %v1019
    %v1083 = vpop.xlane.xlu0 %1082
    %1084 = vadd.xlane.f32.xlu0 %v1021
    %v1085 = vpop.xlane.xlu0 %1084
    %1086 = vadd.xlane.f32.xlu0 %v1023
    %v1087 = vpop.xlane.xlu0 %1086
    %1088 = vadd.xlane.f32.xlu0 %v1025
    %v1089 = vpop.xlane.xlu0 %1088
    %1090 = vadd.xlane.f32.xlu0 %v1027
    %v1091 = vpop.xlane.xlu0 %1090
    %1092 = vadd.xlane.f32.xlu0 %v1029
    %v1093 = vpop.xlane.xlu0 %1092
    %1094 = vadd.xlane.f32.xlu0 %v1031
    %v1095 = vpop.xlane.xlu0 %1094
    %1096 = vadd.xlane.f32.xlu0 %v1033
    %v1097 = vpop.xlane.xlu0 %1096
    %1098 = vadd.xlane.f32.xlu0 %v1035
    %v1099 = vpop.xlane.xlu0 %1098
    %1100 = vadd.xlane.f32.xlu0 %v1037
    %v1101 = vpop.xlane.xlu0 %1100
    %1102 = vadd.xlane.f32.xlu0 %v1039
    %v1103 = vpop.xlane.xlu0 %1102
    %1104 = vadd.xlane.f32.xlu0 %v1041
    %v1105 = vpop.xlane.xlu0 %1104
    %1106 = vadd.xlane.f32.xlu0 %v1043
    %v1107 = vpop.xlane.xlu0 %1106
    %1108 = vadd.xlane.f32.xlu0 %v1045
    %v1109 = vpop.xlane.xlu0 %1108
    %1110 = vadd.xlane.f32.xlu0 %v1047
    %v1111 = vpop.xlane.xlu0 %1110
    %1112 = vadd.xlane.f32.xlu0 %v1049
    %v1113 = vpop.xlane.xlu0 %1112
    %1114 = vadd.xlane.f32.xlu0 %v1051
    %v1115 = vpop.xlane.xlu0 %1114
    %1116 = vadd.xlane.f32.xlu0 %v1053
    %v1117 = vpop.xlane.xlu0 %1116
    %1118 = vadd.xlane.f32.xlu0 %v1055
    %v1119 = vpop.xlane.xlu0 %1118
    %1120 = vadd.xlane.f32.xlu0 %v1057
    %v1121 = vpop.xlane.xlu0 %1120
    %1122 = vadd.xlane.f32.xlu0 %v1059
    %v1123 = vpop.xlane.xlu0 %1122
    %1124 = vadd.xlane.f32.xlu0 %v1061
    %v1125 = vpop.xlane.xlu0 %1124
    %1126 = vadd.xlane.f32.xlu0 %v1063
    %v1127 = vpop.xlane.xlu0 %1126
    %v1128 = vrcp.pop %v1065
    %v1129 = vmul.f32 %v1001, %v1128
    %v1130 = vrcp.pop %v1067
    %v1131 = vmul.f32 %v1003, %v1130
    %v1132 = vrcp.pop %v1069
    %v1133 = vmul.f32 %v1005, %v1132
    %v1134 = vrcp.pop %v1071
    %v1135 = vmul.f32 %v1007, %v1134
    %v1136 = vrcp.pop %v1073
    %v1137 = vmul.f32 %v1009, %v1136
    %v1138 = vrcp.pop %v1075
    %v1139 = vmul.f32 %v1011, %v1138
    %v1140 = vrcp.pop %v1077
    %v1141 = vmul.f32 %v1013, %v1140
    %v1142 = vrcp.pop %v1079
    %v1143 = vmul.f32 %v1015, %v1142
    %v1144 = vrcp.pop %v1081
    %v1145 = vmul.f32 %v1017, %v1144
    %v1146 = vrcp.pop %v1083
    %v1147 = vmul.f32 %v1019, %v1146
    %v1148 = vrcp.pop %v1085
    %v1149 = vmul.f32 %v1021, %v1148
    %v1150 = vrcp.pop %v1087
    %v1151 = vmul.f32 %v1023, %v1150
    %v1152 = vrcp.pop %v1089
    %v1153 = vmul.f32 %v1025, %v1152
    %v1154 = vrcp.pop %v1091
    %v1155 = vmul.f32 %v1027, %v1154
    %v1156 = vrcp.pop %v1093
    %v1157 = vmul.f32 %v1029, %v1156
    %v1158 = vrcp.pop %v1095
    %v1159 = vmul.f32 %v1031, %v1158
    %v1160 = vrcp.pop %v1097
    %v1161 = vmul.f32 %v1033, %v1160
    %v1162 = vrcp.pop %v1099
    %v1163 = vmul.f32 %v1035, %v1162
    %v1164 = vrcp.pop %v1101
    %v1165 = vmul.f32 %v1037, %v1164
    %v1166 = vrcp.pop %v1103
    %v1167 = vmul.f32 %v1039, %v1166
    %v1168 = vrcp.pop %v1105
    %v1169 = vmul.f32 %v1041, %v1168
    %v1170 = vrcp.pop %v1107
    %v1171 = vmul.f32 %v1043, %v1170
    %v1172 = vrcp.pop %v1109
    %v1173 = vmul.f32 %v1045, %v1172
    %v1174 = vrcp.pop %v1111
    %v1175 = vmul.f32 %v1047, %v1174
    %v1176 = vrcp.pop %v1113
    %v1177 = vmul.f32 %v1049, %v1176
    %v1178 = vrcp.pop %v1115
    %v1179 = vmul.f32 %v1051, %v1178
    %v1180 = vrcp.pop %v1117
    %v1181 = vmul.f32 %v1053, %v1180
    %v1182 = vrcp.pop %v1119
    %v1183 = vmul.f32 %v1055, %v1182
    %v1184 = vrcp.pop %v1121
    %v1185 = vmul.f32 %v1057, %v1184
    %v1186 = vrcp.pop %v1123
    %v1187 = vmul.f32 %v1059, %v1186
    %v1188 = vrcp.pop %v1125
    %v1189 = vmul.f32 %v1061, %v1188
    %v1190 = vrcp.pop %v1127
    %v1191 = vmul.f32 %v1063, %v1190
    %1192 = vst [vmem:[#allocation2] sm:$0xff] %v1129
    %1193 = vst [vmem:[#allocation2 + $0x8] sm:$0xff] %v1131
    %1194 = vst [vmem:[#allocation2 + $0x10] sm:$0xff] %v1133
    %1195 = vst [vmem:[#allocation2 + $0x18] sm:$0xff] %v1135
    %1196 = vst [vmem:[#allocation2 + $0x20] sm:$0xff] %v1137
    %1197 = vst [vmem:[#allocation2 + $0x28] sm:$0xff] %v1139
    %1198 = vst [vmem:[#allocation2 + $0x30] sm:$0xff] %v1141
    %1199 = vst [vmem:[#allocation2 + $0x38] sm:$0xff] %v1143
    %1200 = vst [vmem:[#allocation2 + $0x40] sm:$0xff] %v1145
    %1201 = vst [vmem:[#allocation2 + $0x48] sm:$0xff] %v1147
    %1202 = vst [vmem:[#allocation2 + $0x50] sm:$0xff] %v1149
    %1203 = vst [vmem:[#allocation2 + $0x58] sm:$0xff] %v1151
    %1204 = vst [vmem:[#allocation2 + $0x60] sm:$0xff] %v1153
    %1205 = vst [vmem:[#allocation2 + $0x68] sm:$0xff] %v1155
    %1206 = vst [vmem:[#allocation2 + $0x70] sm:$0xff] %v1157
    %1207 = vst [vmem:[#allocation2 + $0x78] sm:$0xff] %v1159
    %1208 = vst [vmem:[#allocation2 + $0x80] sm:$0xff] %v1161
    %1209 = vst [vmem:[#allocation2 + $0x88] sm:$0xff] %v1163
    %1210 = vst [vmem:[#allocation2 + $0x90] sm:$0xff] %v1165
    %1211 = vst [vmem:[#allocation2 + $0x98] sm:$0xff] %v1167
    %1212 = vst [vmem:[#allocation2 + $0xa0] sm:$0xff] %v1169
    %1213 = vst [vmem:[#allocation2 + $0xa8] sm:$0xff] %v1171
    %1214 = vst [vmem:[#allocation2 + $0xb0] sm:$0xff] %v1173
    %1215 = vst [vmem:[#allocation2 + $0xb8] sm:$0xff] %v1175
    %1216 = vst [vmem:[#allocation2 + $0xc0] sm:$0xff] %v1177
    %1217 = vst [vmem:[#allocation2 + $0xc8] sm:$0xff] %v1179
    %1218 = vst [vmem:[#allocation2 + $0xd0] sm:$0xff] %v1181
    %1219 = vst [vmem:[#allocation2 + $0xd8] sm:$0xff] %v1183
    %1220 = vst [vmem:[#allocation2 + $0xe0] sm:$0xff] %v1185
    %1221 = vst [vmem:[#allocation2 + $0xe8] sm:$0xff] %v1187
    %1222 = vst [vmem:[#allocation2 + $0xf0] sm:$0xff] %v1189
    %1223 = vst [vmem:[#allocation2 + $0xf8] sm:$0xff] %v1191
    // Predicated region
    $region30: #{tpu_custom_call.1} parent=1 // pred_check
      _
    $region31: #{tpu_custom_call.1} parent=1 // pred_check_branch
      %1225 = sbr.rel (0) target = $region33
    $region32: #{tpu_custom_call.1} parent=1 // pred_region
      %s1227 = ssub.s32 4096, 4096
      %1228 = vsyncadd [#allocation3], %s1227
      %s1229 = sshll.u32 [#allocation2], 4
      %s1230 = int_to_ptr.vmem [resolvable:$true] %s1229
      %1235 = dma.vmem_to_hbm [thread:$0]  %s1230, 4096, %s7, [#allocation3], 128, 128, 8
    $region33: #{tpu_custom_call.1} parent=1 // pred_fallthru
      _
    // Predicated region
    $region34: #{tpu_custom_call.1} parent=1 // pred_check
      _
    $region35: #{tpu_custom_call.1} parent=1 // pred_check_branch
      %1237 = sbr.rel (0) target = $region37
    $region36: #{tpu_custom_call.1} parent=1 // pred_region
      %1238 = dma.done [#allocation3], 4096
    $region37: #{tpu_custom_call.1} parent=1 // pred_fallthru
      _
    %1239 = vsyncpa [#allocation3], 1

</llo_original>
